<compile_context>
chip_gen: v7x
topology: tpu7x:2x2x1
jax: 0.10.0
libtpu: 0.0.40
codegen_flags: <defaults>
</compile_context>

<pallas_src>
import jax
import jax.numpy as jnp
from jax.experimental import pallas as pl
from jax.experimental.pallas import tpu as pltpu


def _round_up(v, m):
    return -(-v // m) * m


def _col_tile(dim, want):
    """Lane-dim tile (multiple of 128); prefers an exact divisor of `dim`."""
    want = max(128, min(want, _round_up(dim, 128)))
    for c in (want, 1024, 512, 384, 256, 128):
        if c <= want and dim % c == 0:
            return c
    return want  # no divisor: ragged last block, kernel masks the h columns


def _vmem_bytes(tm, tj, hidden, itemsize):
    """Rough pipeline VMEM footprint: double-buffered operands + f32 acc."""
    dbuf = 2 * itemsize * (tm * hidden        # x (constant across j)
                           + 2 * hidden * tj  # w_gate, w_up
                           + tj * hidden      # w_down
                           + tm * hidden)     # out
    acc = 4 * tm * hidden
    return dbuf + acc


def _make_mlp_kernel(intermediate, tj):
    ragged_j = (intermediate % tj) != 0

    def kernel(x_ref, wg_ref, wu_ref, wd_ref, o_ref, acc_ref):
        j = pl.program_id(1)

        @pl.when(j == 0)
        def _():
            acc_ref[...] = jnp.zeros_like(acc_ref)

        x = x_ref[...]
        # Gate / up projections share the resident x row-block; f32 MXU accum.
        g = jnp.dot(x, wg_ref[...], preferred_element_type=jnp.float32)
        u = jnp.dot(x, wu_ref[...], preferred_element_type=jnp.float32)
        # SiLU: exp and the reciprocal both route to the EUP slot.
        h = g * pl.reciprocal(1.0 + jnp.exp(-g), approx=True) * u

        if ragged_j:
            # The last j block reads past the end of Wg/Wu; zero those h
            # columns so garbage never reaches the down-proj accumulator.
            col = jax.lax.broadcasted_iota(jnp.int32, h.shape, 1)
            h = jnp.where(col < intermediate - j * tj, h, 0.0)

        # Fused down projection: the intermediate activation never hits HBM.
        acc_ref[...] += jnp.dot(h.astype(wd_ref.dtype), wd_ref[...],
                                preferred_element_type=jnp.float32)

        @pl.when(j == pl.num_programs(1) - 1)
        def _():
            o_ref[...] = acc_ref[...].astype(o_ref.dtype)

    return kernel


def llama_mlp(x, w_gate, w_up, w_down, *, tile_m=512, tile_j=512,
              compute_dtype=None, vmem_budget_bytes=44 * 1024 * 1024):
    """LLaMA MLP forward: down( silu(x @ Wg) * (x @ Wu) ).

    x:      [..., hidden]
    w_gate: [hidden, intermediate]   (transpose of torch Linear.weight)
    w_up:   [hidden, intermediate]
    w_down: [intermediate, hidden]
    compute_dtype: optional cast for x / weights (e.g. jnp.bfloat16); the
        output keeps x's original dtype and accumulation stays in f32.
    """
    out_dtype = x.dtype
    orig_shape = x.shape
    hidden = orig_shape[-1]
    intermediate = w_gate.shape[1]

    x2d = x.reshape(-1, hidden)
    m = x2d.shape[0]

    if compute_dtype is not None:
        x2d = x2d.astype(compute_dtype)
        w_gate = w_gate.astype(compute_dtype)
        w_up = w_up.astype(compute_dtype)
        w_down = w_down.astype(compute_dtype)

    itemsize = jnp.dtype(x2d.dtype).itemsize

    # Row tile: multiple of 8. A ragged last row-block is safe: every output
    # row depends only on its own x row and Pallas masks the ragged store.
    tm = min(_round_up(tile_m, 8), _round_up(m, 8))
    # Intermediate-dim tile (gate/up output cols == down-proj reduction axis).
    tj = _col_tile(intermediate, tile_j)

    # Shrink tiles until the pipeline fits the VMEM budget (v7x 64 MiB safe;
    # typical LLaMA shapes keep the defaults).
    while _vmem_bytes(tm, tj, hidden, itemsize) > vmem_budget_bytes:
        if tj > 128:
            tj = _col_tile(intermediate, max(128, _round_up(tj // 2, 128)))
        elif tm > 8:
            tm = max(8, _round_up(tm // 2, 8))
        else:
            break

    grid = (pl.cdiv(m, tm), pl.cdiv(intermediate, tj))

    out2d = pl.pallas_call(
        _make_mlp_kernel(intermediate, tj),
        out_shape=jax.ShapeDtypeStruct((m, hidden), out_dtype),
        grid_spec=pltpu.PrefetchScalarGridSpec(
            num_scalar_prefetch=0,
            grid=grid,
            in_specs=[
                # x row-block is constant across j -> DMA'd once per i.
                pl.BlockSpec((tm, hidden), lambda i, j: (i, 0)),
                pl.BlockSpec((hidden, tj), lambda i, j: (0, j)),
                pl.BlockSpec((hidden, tj), lambda i, j: (0, j)),
                pl.BlockSpec((tj, hidden), lambda i, j: (j, 0)),
            ],
            out_specs=pl.BlockSpec((tm, hidden), lambda i, j: (i, 0)),
            scratch_shapes=[pltpu.VMEM((tm, hidden), jnp.float32)],
        ),
        compiler_params=pltpu.CompilerParams(
            dimension_semantics=("parallel", "arbitrary"),
            # Headroom-safe on v7x (64 MiB physical); plenty on v5e/v6e.
            vmem_limit_bytes=48 * 1024 * 1024,
        ),
    )(x2d, w_gate, w_up, w_down)

    return out2d.reshape(orig_shape[:-1] + (hidden,))


if __name__ == "__main__":
    key = jax.random.PRNGKey(0)
    batch, seq, hidden, intermediate = 2, 8, 128, 256
    kx, kg, ku, kd = jax.random.split(key, 4)

    x = jax.random.normal(kx, (batch, seq, hidden), dtype=jnp.float32)
    # (in, out) layouts == transpose of torch Linear.weight; ~1/sqrt(fan_in).
    w_gate = jax.random.normal(kg, (hidden, intermediate), jnp.float32) * (hidden ** -0.5)
    w_up = jax.random.normal(ku, (hidden, intermediate), jnp.float32) * (hidden ** -0.5)
    w_down = jax.random.normal(kd, (intermediate, hidden), jnp.float32) * (intermediate ** -0.5)

    y = jax.block_until_ready(llama_mlp(x, w_gate, w_up, w_down))

    # Pure-JAX reference (highest precision to avoid MXU default-precision fuzz).
    x2 = x.reshape(-1, hidden)
    gate = jnp.dot(x2, w_gate, precision=jax.lax.Precision.HIGHEST)
    up = jnp.dot(x2, w_up, precision=jax.lax.Precision.HIGHEST)
    h_ref = (gate * jax.nn.sigmoid(gate)) * up
    ref = jnp.dot(h_ref, w_down, precision=jax.lax.Precision.HIGHEST).reshape(x.shape)

    assert y.shape == ref.shape and y.dtype == ref.dtype
    max_err = float(jnp.max(jnp.abs(y - ref)))
    assert jnp.allclose(y, ref, rtol=2e-2, atol=2e-2), f"max abs err = {max_err}"

    print("KERNEL_OK")
</pallas_src>

<mosaic_0001>
module attributes {stable_mosaic.version = 11 : i64} {
  func.func @kernel(%arg0: i32, %arg1: i32, %arg2: memref<16x128xf32, #tpu.memory_space<vmem>>, %arg3: memref<128x256xf32, #tpu.memory_space<vmem>>, %arg4: memref<128x256xf32, #tpu.memory_space<vmem>>, %arg5: memref<256x128xf32, #tpu.memory_space<vmem>>, %arg6: memref<16x128xf32, #tpu.memory_space<vmem>>, %arg7: memref<16x128xf32, #tpu.memory_space<vmem>>) attributes {dimension_semantics = [#tpu.dimension_semantics<parallel>, #tpu.dimension_semantics<arbitrary>], iteration_bounds = array<i64: 1, 1>, scalar_prefetch = 0 : i64, scratch_operands = 1 : i64, tpu.core_type = #tpu.core_type<tc>, window_params = [{transform_indices = @transform_0, window_bounds = array<i64: 16, 128>}, {transform_indices = @transform_1, window_bounds = array<i64: 128, 256>}, {transform_indices = @transform_2, window_bounds = array<i64: 128, 256>}, {transform_indices = @transform_3, window_bounds = array<i64: 256, 128>}, {transform_indices = @transform_4, window_bounds = array<i64: 16, 128>}]} {
    %c0_i32 = arith.constant 0 : i32
    %0 = arith.cmpi eq, %arg1, %c0_i32 : i32
    %1 = arith.extui %0 : i1 to i32
    %c0_i32_0 = arith.constant 0 : i32
    %2 = arith.cmpi ne, %1, %c0_i32_0 : i32
    scf.if %2 {
      %cst_18 = arith.constant 0.000000e+00 : f32
      %24 = vector.broadcast %cst_18 : f32 to vector<16x128xf32>
      %c0_19 = arith.constant 0 : index
      %c0_20 = arith.constant 0 : index
      %25 = vector.load %arg7[%c0_19, %c0_20] : memref<16x128xf32, #tpu.memory_space<vmem>>, vector<16x128xf32>
      tpu.vector_store %arg7[%c0_19, %c0_20], %24 {strides = array<i32>} : memref<16x128xf32, #tpu.memory_space<vmem>>, vector<16x128xf32>,
    } else {
    }
    %c0 = arith.constant 0 : index
    %c0_1 = arith.constant 0 : index
    %3 = vector.load %arg2[%c0, %c0_1] : memref<16x128xf32, #tpu.memory_space<vmem>>, vector<16x128xf32>
    %c0_2 = arith.constant 0 : index
    %c0_3 = arith.constant 0 : index
    %4 = vector.load %arg3[%c0_2, %c0_3] : memref<128x256xf32, #tpu.memory_space<vmem>>, vector<128x256xf32>
    %cst = arith.constant dense<0.000000e+00> : vector<16x256xf32>
    %5 = tpu.matmul %3, %4, %cst {dimension_numbers = #tpu.dot_dimension_numbers<[1], [0], [0], [1], [0, 0, 1, 1], [], []>} : vector<16x128xf32>, vector<128x256xf32>, vector<16x256xf32> -> vector<16x256xf32>
    %c0_4 = arith.constant 0 : index
    %c0_5 = arith.constant 0 : index
    %6 = vector.load %arg4[%c0_4, %c0_5] : memref<128x256xf32, #tpu.memory_space<vmem>>, vector<128x256xf32>
    %cst_6 = arith.constant dense<0.000000e+00> : vector<16x256xf32>
    %7 = tpu.matmul %3, %6, %cst_6 {dimension_numbers = #tpu.dot_dimension_numbers<[1], [0], [0], [1], [0, 0, 1, 1], [], []>} : vector<16x128xf32>, vector<128x256xf32>, vector<16x256xf32> -> vector<16x256xf32>
    %cst_7 = arith.constant 0.000000e+00 : f32
    %8 = vector.broadcast %cst_7 : f32 to vector<16x256xf32>
    %9 = arith.subf %8, %5 : vector<16x256xf32>
    %10 = math.exp %9 : vector<16x256xf32>
    %cst_8 = arith.constant 1.000000e+00 : f32
    %11 = vector.broadcast %cst_8 : f32 to vector<16x256xf32>
    %12 = arith.addf %11, %10 : vector<16x256xf32>
    %13 = tpu.reciprocal %12 {approx = true} : vector<16x256xf32> -> vector<16x256xf32>
    %14 = arith.mulf %5, %13 : vector<16x256xf32>
    %15 = arith.mulf %14, %7 : vector<16x256xf32>
    %c0_9 = arith.constant 0 : index
    %c0_10 = arith.constant 0 : index
    %16 = vector.load %arg7[%c0_9, %c0_10] : memref<16x128xf32, #tpu.memory_space<vmem>>, vector<16x128xf32>
    %c0_11 = arith.constant 0 : index
    %c0_12 = arith.constant 0 : index
    %17 = vector.load %arg5[%c0_11, %c0_12] : memref<256x128xf32, #tpu.memory_space<vmem>>, vector<256x128xf32>
    %cst_13 = arith.constant dense<0.000000e+00> : vector<16x128xf32>
    %18 = tpu.matmul %15, %17, %cst_13 {dimension_numbers = #tpu.dot_dimension_numbers<[1], [0], [0], [1], [0, 0, 1, 1], [], []>} : vector<16x256xf32>, vector<256x128xf32>, vector<16x128xf32> -> vector<16x128xf32>
    %19 = arith.addf %16, %18 : vector<16x128xf32>
    %c0_14 = arith.constant 0 : index
    %c0_15 = arith.constant 0 : index
    %20 = vector.load %arg7[%c0_14, %c0_15] : memref<16x128xf32, #tpu.memory_space<vmem>>, vector<16x128xf32>
    tpu.vector_store %arg7[%c0_14, %c0_15], %19 {strides = array<i32>} : memref<16x128xf32, #tpu.memory_space<vmem>>, vector<16x128xf32>,
    %c0_i32_16 = arith.constant 0 : i32
    %21 = arith.cmpi eq, %arg1, %c0_i32_16 : i32
    %22 = arith.extui %21 : i1 to i32
    %c0_i32_17 = arith.constant 0 : i32
    %23 = arith.cmpi ne, %22, %c0_i32_17 : i32
    scf.if %23 {
      %c0_18 = arith.constant 0 : index
      %c0_19 = arith.constant 0 : index
      %24 = vector.load %arg7[%c0_18, %c0_19] : memref<16x128xf32, #tpu.memory_space<vmem>>, vector<16x128xf32>
      %c0_20 = arith.constant 0 : index
      %c0_21 = arith.constant 0 : index
      %25 = vector.load %arg6[%c0_20, %c0_21] : memref<16x128xf32, #tpu.memory_space<vmem>>, vector<16x128xf32>
      tpu.vector_store %arg6[%c0_20, %c0_21], %24 {strides = array<i32>} : memref<16x128xf32, #tpu.memory_space<vmem>>, vector<16x128xf32>,
    } else {
    }
    return
  }
  func.func @transform_0(%arg0: i32, %arg1: i32) -> (i32, i32) {
    %c0_i32 = arith.constant 0 : i32
    %c0_i32_0 = arith.constant 0 : i32
    return %arg0, %c0_i32 : i32, i32
  }
  func.func @transform_1(%arg0: i32, %arg1: i32) -> (i32, i32) {
    %c0_i32 = arith.constant 0 : i32
    %c0_i32_0 = arith.constant 0 : i32
    return %c0_i32, %arg1 : i32, i32
  }
  func.func @transform_2(%arg0: i32, %arg1: i32) -> (i32, i32) {
    %c0_i32 = arith.constant 0 : i32
    %c0_i32_0 = arith.constant 0 : i32
    return %c0_i32, %arg1 : i32, i32
  }
  func.func @transform_3(%arg0: i32, %arg1: i32) -> (i32, i32) {
    %c0_i32 = arith.constant 0 : i32
    %c0_i32_0 = arith.constant 0 : i32
    return %arg1, %c0_i32 : i32, i32
  }
  func.func @transform_4(%arg0: i32, %arg1: i32) -> (i32, i32) {
    %c0_i32 = arith.constant 0 : i32
    %c0_i32_0 = arith.constant 0 : i32
    return %arg0, %c0_i32 : i32, i32
  }
}

</mosaic_0001>

<llo_original>
// kernel: tpu_custom_call.1
$region0: #{tpu_custom_call.1}
  #allocation0 [shape = 'u32[]', space=smem, size = 0x4, offset = 0x4, fixed_abs, tag = 'smem constant byte address 0x4 - core index']
  #allocation1 [shape = 'u32[144,128]{1,0:T(1,128)}', space=vmem, size = 0x12000, scoped, tag = 'internal scratch']
  #allocation2 [shape = 'f32[16,128]{1,0:T(8,128)}', space=vmem, size = 0x2000, scoped, tag = 'scratch operand']
  %s0 = inlined_call_operand.hbm [shape: f32[16,128], index: 0, kind: input, shape index: {}]
  %s1 = inlined_call_operand.hbm [shape: f32[128,256], index: 1, kind: input, shape index: {}]
  %s2 = inlined_call_operand.hbm [shape: f32[128,256], index: 2, kind: input, shape index: {}]
  %s3 = inlined_call_operand.hbm [shape: f32[256,128], index: 3, kind: input, shape index: {}]
  %s4 = inlined_call_operand.hbm [shape: f32[16,128], index: 4, kind: output, shape index: {}]
  %s5 = sld [smem:[#allocation0]]
  $region50: #{tpu_custom_call.1} parent=0
    _
  %s7 = ssub.s32 1, %s5
  %s8 = scalar_select 0, %s7, %s5
  $region1: #{tpu_custom_call.1} parent=0
    #allocation3 [shape = 'u8[8192]{0}', space=vmem, size = 0x2000, scoped, tag = 'input window, operand 0, single buffered']
    #allocation4 [shape = 's32[1]{0}', space=sflag, size = 0x4, scoped, tag = 'scoped memory for tpu_custom_call.1']
    #allocation5 [shape = 's32[1]{0}', space=sflag, size = 0x4, scoped, tag = 'scoped memory for tpu_custom_call.1']
    #allocation6 [shape = 'u8[131072]{0}', space=vmem, size = 0x20000, scoped, tag = 'input window, operand 1, single buffered']
    #allocation7 [shape = 's32[1]{0}', space=sflag, size = 0x4, scoped, tag = 'scoped memory for tpu_custom_call.1']
    #allocation8 [shape = 'u8[131072]{0}', space=vmem, size = 0x20000, scoped, tag = 'input window, operand 2, single buffered']
    #allocation9 [shape = 'u8[131072]{0}', space=vmem, size = 0x20000, scoped, tag = 'input window, operand 3, single buffered']
    #allocation10 [shape = 's32[1]{0}', space=sflag, size = 0x4, scoped, tag = 'scoped memory for tpu_custom_call.1']
    #allocation11 [shape = 'u8[8192]{0}', space=vmem, size = 0x2000, scoped, tag = 'output window, operand 0, single buffered']
    %9 = vsyncpa [#allocation4], 0
    %10 = vsyncpa [#allocation7], 0
    %11 = vsyncpa [#allocation10], 0
    %12 = vsyncpa [#allocation5], 0
    // Predicated region
    $region2: #{tpu_custom_call.1} parent=1 // pred_check
      _
    $region3: #{tpu_custom_call.1} parent=1 // pred_check_branch
      %14 = sbr.rel (0) target = $region5
    $region4: #{tpu_custom_call.1} parent=1 // pred_region
      %s16 = ssub.s32 256, 256
      %17 = vsyncadd [#allocation4], %s16
      %s18 = sshll.u32 [#allocation3], 4
      %s19 = int_to_ptr.vmem [resolvable:$true] %s18
      %24 = dma.hbm_to_vmem [thread:$0]  %s0, 256, %s19, [#allocation4], 128, 128, 8
    $region5: #{tpu_custom_call.1} parent=1 // pred_fallthru
      _
    // Predicated region
    $region6: #{tpu_custom_call.1} parent=1 // pred_check
      _
    $region7: #{tpu_custom_call.1} parent=1 // pred_check_branch
      %26 = sbr.rel (0) target = $region9
    $region8: #{tpu_custom_call.1} parent=1 // pred_region
      %s28 = ssub.s32 4096, 4096
      %29 = vsyncadd [#allocation7], %s28
      %s30 = sshll.u32 [#allocation6], 4
      %s31 = int_to_ptr.vmem [resolvable:$true] %s30
      %36 = dma.hbm_to_vmem [thread:$0]  %s1, 4096, %s31, [#allocation7], 256, 256, 16
    $region9: #{tpu_custom_call.1} parent=1 // pred_fallthru
      _
    // Predicated region
    $region10: #{tpu_custom_call.1} parent=1 // pred_check
      _
    $region11: #{tpu_custom_call.1} parent=1 // pred_check_branch
      %38 = sbr.rel (0) target = $region13
    $region12: #{tpu_custom_call.1} parent=1 // pred_region
      %s40 = ssub.s32 4096, 4096
      %41 = vsyncadd [#allocation7], %s40
      %s42 = sshll.u32 [#allocation8], 4
      %s43 = int_to_ptr.vmem [resolvable:$true] %s42
      %48 = dma.hbm_to_vmem [thread:$0]  %s2, 4096, %s43, [#allocation7], 256, 256, 16
    $region13: #{tpu_custom_call.1} parent=1 // pred_fallthru
      _
    // Predicated region
    $region14: #{tpu_custom_call.1} parent=1 // pred_check
      _
    $region15: #{tpu_custom_call.1} parent=1 // pred_check_branch
      %50 = sbr.rel (0) target = $region17
    $region16: #{tpu_custom_call.1} parent=1 // pred_region
      %s52 = ssub.s32 4096, 4096
      %53 = vsyncadd [#allocation10], %s52
      %s54 = sshll.u32 [#allocation9], 4
      %s55 = int_to_ptr.vmem [resolvable:$true] %s54
      %60 = dma.hbm_to_vmem [thread:$0]  %s3, 4096, %s55, [#allocation10], 128, 128, 8
    $region17: #{tpu_custom_call.1} parent=1 // pred_fallthru
      _
    // Predicated region
    $region18: #{tpu_custom_call.1} parent=1 // pred_check
      _
    $region19: #{tpu_custom_call.1} parent=1 // pred_check_branch
      %62 = sbr.rel (0) target = $region21
    $region20: #{tpu_custom_call.1} parent=1 // pred_region
      %63 = dma.done [#allocation4], 256
    $region21: #{tpu_custom_call.1} parent=1 // pred_fallthru
      _
    // Predicated region
    $region22: #{tpu_custom_call.1} parent=1 // pred_check
      _
    $region23: #{tpu_custom_call.1} parent=1 // pred_check_branch
      %65 = sbr.rel (0) target = $region25
    $region24: #{tpu_custom_call.1} parent=1 // pred_region
      %66 = dma.done [#allocation7], 4096
    $region25: #{tpu_custom_call.1} parent=1 // pred_fallthru
      _
    // Predicated region
    $region26: #{tpu_custom_call.1} parent=1 // pred_check
      _
    $region27: #{tpu_custom_call.1} parent=1 // pred_check_branch
      %68 = sbr.rel (0) target = $region29
    $region28: #{tpu_custom_call.1} parent=1 // pred_region
      %69 = dma.done [#allocation7], 4096
    $region29: #{tpu_custom_call.1} parent=1 // pred_fallthru
      _
    // Predicated region
    $region30: #{tpu_custom_call.1} parent=1 // pred_check
      _
    $region31: #{tpu_custom_call.1} parent=1 // pred_check_branch
      %71 = sbr.rel (0) target = $region33
    $region32: #{tpu_custom_call.1} parent=1 // pred_region
      %72 = dma.done [#allocation10], 4096
    $region33: #{tpu_custom_call.1} parent=1 // pred_fallthru
      _
    %p73 = scmp.eq.s32.totalorder 0, 0
    // Predicated region
    $region34: #{tpu_custom_call.1} parent=1 // pred_check
      %p74 = pneg %p73
    $region35: #{tpu_custom_call.1} parent=1 // pred_check_branch
      %76 = sbr.rel (%p74) target = $region37
    $region36: #{tpu_custom_call.1} parent=1 // pred_region
      %77 = vst [vmem:[#allocation2] sm:$0xff] 0.0
      %78 = vst [vmem:[#allocation2 + $0x8] sm:$0xff] 0.0
    $region37: #{tpu_custom_call.1} parent=1 // pred_fallthru
      _
    %v79 = vld [vmem:[#allocation3] sm:$0xff]
    %v80 = vld [vmem:[#allocation3 + $0x8] sm:$0xff]
    %v81 = vld [vmem:[#allocation6] sm:$0xff]
    %v82 = vld [vmem:[#allocation6 + $0x8] sm:$0xff]
    %v83 = vld [vmem:[#allocation6 + $0x10] sm:$0xff]
    %v84 = vld [vmem:[#allocation6 + $0x18] sm:$0xff]
    %v85 = vld [vmem:[#allocation6 + $0x20] sm:$0xff]
    %v86 = vld [vmem:[#allocation6 + $0x28] sm:$0xff]
    %v87 = vld [vmem:[#allocation6 + $0x30] sm:$0xff]
    %v88 = vld [vmem:[#allocation6 + $0x38] sm:$0xff]
    %v89 = vld [vmem:[#allocation6 + $0x40] sm:$0xff]
    %v90 = vld [vmem:[#allocation6 + $0x48] sm:$0xff]
    %v91 = vld [vmem:[#allocation6 + $0x50] sm:$0xff]
    %v92 = vld [vmem:[#allocation6 + $0x58] sm:$0xff]
    %v93 = vld [vmem:[#allocation6 + $0x60] sm:$0xff]
    %v94 = vld [vmem:[#allocation6 + $0x68] sm:$0xff]
    %v95 = vld [vmem:[#allocation6 + $0x70] sm:$0xff]
    %v96 = vld [vmem:[#allocation6 + $0x78] sm:$0xff]
    %v97 = vld [vmem:[#allocation6 + $0x80] sm:$0xff]
    %v98 = vld [vmem:[#allocation6 + $0x88] sm:$0xff]
    %v99 = vld [vmem:[#allocation6 + $0x90] sm:$0xff]
    %v100 = vld [vmem:[#allocation6 + $0x98] sm:$0xff]
    %v101 = vld [vmem:[#allocation6 + $0xa0] sm:$0xff]
    %v102 = vld [vmem:[#allocation6 + $0xa8] sm:$0xff]
    %v103 = vld [vmem:[#allocation6 + $0xb0] sm:$0xff]
    %v104 = vld [vmem:[#allocation6 + $0xb8] sm:$0xff]
    %v105 = vld [vmem:[#allocation6 + $0xc0] sm:$0xff]
    %v106 = vld [vmem:[#allocation6 + $0xc8] sm:$0xff]
    %v107 = vld [vmem:[#allocation6 + $0xd0] sm:$0xff]
    %v108 = vld [vmem:[#allocation6 + $0xd8] sm:$0xff]
    %v109 = vld [vmem:[#allocation6 + $0xe0] sm:$0xff]
    %v110 = vld [vmem:[#allocation6 + $0xe8] sm:$0xff]
    %v111 = vld [vmem:[#allocation6 + $0xf0] sm:$0xff]
    %v112 = vld [vmem:[#allocation6 + $0xf8] sm:$0xff]
    %113 = vmatprep.subr.mxu0 %v82
    %114 = vmatpush1.msra.mxu0 %v81
    %115 = vmatprep.subr.mxu0 %v84
    %116 = vmatpush1.msra.mxu0 %v83
    %117 = vmatprep.subr.mxu0 %v86
    %118 = vmatpush1.msra.mxu0 %v85
    %119 = vmatprep.subr.mxu0 %v88
    %120 = vmatpush1.msra.mxu0 %v87
    %121 = vmatprep.subr.mxu0 %v90
    %122 = vmatpush1.msra.mxu0 %v89
    %123 = vmatprep.subr.mxu0 %v92
    %124 = vmatpush1.msra.mxu0 %v91
    %125 = vmatprep.subr.mxu0 %v94
    %126 = vmatpush1.msra.mxu0 %v93
    %127 = vmatprep.subr.mxu0 %v96
    %128 = vmatpush1.msra.mxu0 %v95
    %129 = vmatprep.subr.mxu0 %v98
    %130 = vmatpush1.msra.mxu0 %v97
    %131 = vmatprep.subr.mxu0 %v100
    %132 = vmatpush1.msra.mxu0 %v99
    %133 = vmatprep.subr.mxu0 %v102
    %134 = vmatpush1.msra.mxu0 %v101
    %135 = vmatprep.subr.mxu0 %v104
    %136 = vmatpush1.msra.mxu0 %v103
    %137 = vmatprep.subr.mxu0 %v106
    %138 = vmatpush1.msra.mxu0 %v105
    %139 = vmatprep.subr.mxu0 %v108
    %140 = vmatpush1.msra.mxu0 %v107
    %141 = vmatprep.subr.mxu0 %v110
    %142 = vmatpush1.msra.mxu0 %v109
    %143 = vmatprep.subr.mxu0 %v112
    %144 = vmatpush1.msra.mxu0 %v111
    %145 = vmatprep.subr.mxu0 0.0
    %146 = vmatpush1.msra.mxu0 0.0
    %147 = vmatprep.subr.mxu0 0.0
    %148 = vmatpush1.msra.mxu0 0.0
    %149 = vmatprep.subr.mxu0 0.0
    %150 = vmatpush1.msra.mxu0 0.0
    %151 = vmatprep.subr.mxu0 0.0
    %152 = vmatpush1.msra.mxu0 0.0
    %153 = vmatprep.subr.mxu0 0.0
    %154 = vmatpush1.msra.mxu0 0.0
    %155 = vmatprep.subr.mxu0 0.0
    %156 = vmatpush1.msra.mxu0 0.0
    %157 = vmatprep.subr.mxu0 0.0
    %158 = vmatpush1.msra.mxu0 0.0
    %159 = vmatprep.subr.mxu0 0.0
    %160 = vmatpush1.msra.mxu0 0.0
    %161 = vmatprep.subr.mxu0 0.0
    %162 = vmatpush1.msra.mxu0 0.0
    %163 = vmatprep.subr.mxu0 0.0
    %164 = vmatpush1.msra.mxu0 0.0
    %165 = vmatprep.subr.mxu0 0.0
    %166 = vmatpush1.msra.mxu0 0.0
    %167 = vmatprep.subr.mxu0 0.0
    %168 = vmatpush1.msra.mxu0 0.0
    %169 = vmatprep.subr.mxu0 0.0
    %170 = vmatpush1.msra.mxu0 0.0
    %171 = vmatprep.subr.mxu0 0.0
    %172 = vmatpush1.msra.mxu0 0.0
    %173 = vmatprep.subr.mxu0 0.0
    %174 = vmatpush1.msra.mxu0 0.0
    %175 = vmatprep.subr.mxu0 0.0
    %176 = vmatpush1.msra.mxu0 0.0
    %177 = vmatprep.mubr.f32.mxu0 0.0
    %178 = vmatmul.mubr.f32.gmra.mrb[0].mxu0 %v79
    %v179 = vpop.f32.mrb[0].mxu0
    %v180 = vadd.f32 0.0, %v179
    %v181 = vpop.f32.mrb[0].mxu0
    %v182 = vadd.f32 0.0, %v181
    %183 = vmatprep.mubr.f32.mxu0 0.0
    %184 = vmatmul.mubr.f32.gmra.mrb[0].mxu0 %v80
    %v185 = vpop.f32.mrb[0].mxu0
    %v186 = vadd.f32 0.0, %v185
    %v187 = vpop.f32.mrb[0].mxu0
    %v188 = vadd.f32 0.0, %v187
    %189 = vdwg.mxu0
    %v190 = vld [vmem:[#allocation8] sm:$0xff]
    %v191 = vld [vmem:[#allocation8 + $0x8] sm:$0xff]
    %v192 = vld [vmem:[#allocation8 + $0x10] sm:$0xff]
    %v193 = vld [vmem:[#allocation8 + $0x18] sm:$0xff]
    %v194 = vld [vmem:[#allocation8 + $0x20] sm:$0xff]
    %v195 = vld [vmem:[#allocation8 + $0x28] sm:$0xff]
    %v196 = vld [vmem:[#allocation8 + $0x30] sm:$0xff]
    %v197 = vld [vmem:[#allocation8 + $0x38] sm:$0xff]
    %v198 = vld [vmem:[#allocation8 + $0x40] sm:$0xff]
    %v199 = vld [vmem:[#allocation8 + $0x48] sm:$0xff]
    %v200 = vld [vmem:[#allocation8 + $0x50] sm:$0xff]
    %v201 = vld [vmem:[#allocation8 + $0x58] sm:$0xff]
    %v202 = vld [vmem:[#allocation8 + $0x60] sm:$0xff]
    %v203 = vld [vmem:[#allocation8 + $0x68] sm:$0xff]
    %v204 = vld [vmem:[#allocation8 + $0x70] sm:$0xff]
    %v205 = vld [vmem:[#allocation8 + $0x78] sm:$0xff]
    %v206 = vld [vmem:[#allocation8 + $0x80] sm:$0xff]
    %v207 = vld [vmem:[#allocation8 + $0x88] sm:$0xff]
    %v208 = vld [vmem:[#allocation8 + $0x90] sm:$0xff]
    %v209 = vld [vmem:[#allocation8 + $0x98] sm:$0xff]
    %v210 = vld [vmem:[#allocation8 + $0xa0] sm:$0xff]
    %v211 = vld [vmem:[#allocation8 + $0xa8] sm:$0xff]
    %v212 = vld [vmem:[#allocation8 + $0xb0] sm:$0xff]
    %v213 = vld [vmem:[#allocation8 + $0xb8] sm:$0xff]
    %v214 = vld [vmem:[#allocation8 + $0xc0] sm:$0xff]
    %v215 = vld [vmem:[#allocation8 + $0xc8] sm:$0xff]
    %v216 = vld [vmem:[#allocation8 + $0xd0] sm:$0xff]
    %v217 = vld [vmem:[#allocation8 + $0xd8] sm:$0xff]
    %v218 = vld [vmem:[#allocation8 + $0xe0] sm:$0xff]
    %v219 = vld [vmem:[#allocation8 + $0xe8] sm:$0xff]
    %v220 = vld [vmem:[#allocation8 + $0xf0] sm:$0xff]
    %v221 = vld [vmem:[#allocation8 + $0xf8] sm:$0xff]
    %222 = vmatprep.subr.mxu0 %v191
    %223 = vmatpush1.msra.mxu0 %v190
    %224 = vmatprep.subr.mxu0 %v193
    %225 = vmatpush1.msra.mxu0 %v192
    %226 = vmatprep.subr.mxu0 %v195
    %227 = vmatpush1.msra.mxu0 %v194
    %228 = vmatprep.subr.mxu0 %v197
    %229 = vmatpush1.msra.mxu0 %v196
    %230 = vmatprep.subr.mxu0 %v199
    %231 = vmatpush1.msra.mxu0 %v198
    %232 = vmatprep.subr.mxu0 %v201
    %233 = vmatpush1.msra.mxu0 %v200
    %234 = vmatprep.subr.mxu0 %v203
    %235 = vmatpush1.msra.mxu0 %v202
    %236 = vmatprep.subr.mxu0 %v205
    %237 = vmatpush1.msra.mxu0 %v204
    %238 = vmatprep.subr.mxu0 %v207
    %239 = vmatpush1.msra.mxu0 %v206
    %240 = vmatprep.subr.mxu0 %v209
    %241 = vmatpush1.msra.mxu0 %v208
    %242 = vmatprep.subr.mxu0 %v211
    %243 = vmatpush1.msra.mxu0 %v210
    %244 = vmatprep.subr.mxu0 %v213
    %245 = vmatpush1.msra.mxu0 %v212
    %246 = vmatprep.subr.mxu0 %v215
    %247 = vmatpush1.msra.mxu0 %v214
    %248 = vmatprep.subr.mxu0 %v217
    %249 = vmatpush1.msra.mxu0 %v216
    %250 = vmatprep.subr.mxu0 %v219
    %251 = vmatpush1.msra.mxu0 %v218
    %252 = vmatprep.subr.mxu0 %v221
    %253 = vmatpush1.msra.mxu0 %v220
    %254 = vmatprep.subr.mxu0 0.0
    %255 = vmatpush1.msra.mxu0 0.0
    %256 = vmatprep.subr.mxu0 0.0
    %257 = vmatpush1.msra.mxu0 0.0
    %258 = vmatprep.subr.mxu0 0.0
    %259 = vmatpush1.msra.mxu0 0.0
    %260 = vmatprep.subr.mxu0 0.0
    %261 = vmatpush1.msra.mxu0 0.0
    %262 = vmatprep.subr.mxu0 0.0
    %263 = vmatpush1.msra.mxu0 0.0
    %264 = vmatprep.subr.mxu0 0.0
    %265 = vmatpush1.msra.mxu0 0.0
    %266 = vmatprep.subr.mxu0 0.0
    %267 = vmatpush1.msra.mxu0 0.0
    %268 = vmatprep.subr.mxu0 0.0
    %269 = vmatpush1.msra.mxu0 0.0
    %270 = vmatprep.subr.mxu0 0.0
    %271 = vmatpush1.msra.mxu0 0.0
    %272 = vmatprep.subr.mxu0 0.0
    %273 = vmatpush1.msra.mxu0 0.0
    %274 = vmatprep.subr.mxu0 0.0
    %275 = vmatpush1.msra.mxu0 0.0
    %276 = vmatprep.subr.mxu0 0.0
    %277 = vmatpush1.msra.mxu0 0.0
    %278 = vmatprep.subr.mxu0 0.0
    %279 = vmatpush1.msra.mxu0 0.0
    %280 = vmatprep.subr.mxu0 0.0
    %281 = vmatpush1.msra.mxu0 0.0
    %282 = vmatprep.subr.mxu0 0.0
    %283 = vmatpush1.msra.mxu0 0.0
    %284 = vmatprep.subr.mxu0 0.0
    %285 = vmatpush1.msra.mxu0 0.0
    %286 = vmatprep.mubr.f32.mxu0 0.0
    %287 = vmatmul.mubr.f32.gmra.mrb[0].mxu0 %v79
    %v288 = vpop.f32.mrb[0].mxu0
    %v289 = vadd.f32 0.0, %v288
    %v290 = vpop.f32.mrb[0].mxu0
    %v291 = vadd.f32 0.0, %v290
    %292 = vmatprep.mubr.f32.mxu0 0.0
    %293 = vmatmul.mubr.f32.gmra.mrb[0].mxu0 %v80
    %v294 = vpop.f32.mrb[0].mxu0
    %v295 = vadd.f32 0.0, %v294
    %v296 = vpop.f32.mrb[0].mxu0
    %v297 = vadd.f32 0.0, %v296
    %298 = vdwg.mxu0
    %v299 = vsub.f32 0.0, %v180
    %v300 = vsub.f32 0.0, %v182
    %v301 = vsub.f32 0.0, %v186
    %v302 = vsub.f32 0.0, %v188
    %v303 = vmul.f32 %v299, 1.442695
    %v304 = vpow.pop %v303
    %v305 = vmul.f32 %v300, 1.442695
    %v306 = vpow.pop %v305
    %v307 = vmul.f32 %v301, 1.442695
    %v308 = vpow.pop %v307
    %v309 = vmul.f32 %v302, 1.442695
    %v310 = vpow.pop %v309
    %v311 = vadd.f32 %v304, 1.0
    %v312 = vadd.f32 %v306, 1.0
    %v313 = vadd.f32 %v308, 1.0
    %v314 = vadd.f32 %v310, 1.0
    %v315 = vrcp.pop %v311
    %v316 = vrcp.pop %v312
    %v317 = vrcp.pop %v313
    %v318 = vrcp.pop %v314
    %v319 = vmul.f32 %v180, %v315
    %v320 = vmul.f32 %v182, %v316
    %v321 = vmul.f32 %v186, %v317
    %v322 = vmul.f32 %v188, %v318
    %v323 = vmul.f32 %v319, %v289
    %v324 = vmul.f32 %v320, %v291
    %v325 = vmul.f32 %v321, %v295
    %v326 = vmul.f32 %v322, %v297
    %v327 = vld [vmem:[#allocation2] sm:$0xff]
    %v328 = vld [vmem:[#allocation2 + $0x8] sm:$0xff]
    %v329 = vld [vmem:[#allocation9] sm:$0xff]
    %v330 = vld [vmem:[#allocation9 + $0x8] sm:$0xff]
    %v331 = vld [vmem:[#allocation9 + $0x10] sm:$0xff]
    %v332 = vld [vmem:[#allocation9 + $0x18] sm:$0xff]
    %v333 = vld [vmem:[#allocation9 + $0x20] sm:$0xff]
    %v334 = vld [vmem:[#allocation9 + $0x28] sm:$0xff]
    %v335 = vld [vmem:[#allocation9 + $0x30] sm:$0xff]
    %v336 = vld [vmem:[#allocation9 + $0x38] sm:$0xff]
    %v337 = vld [vmem:[#allocation9 + $0x40] sm:$0xff]
    %v338 = vld [vmem:[#allocation9 + $0x48] sm:$0xff]
    %v339 = vld [vmem:[#allocation9 + $0x50] sm:$0xff]
    %v340 = vld [vmem:[#allocation9 + $0x58] sm:$0xff]
    %v341 = vld [vmem:[#allocation9 + $0x60] sm:$0xff]
    %v342 = vld [vmem:[#allocation9 + $0x68] sm:$0xff]
    %v343 = vld [vmem:[#allocation9 + $0x70] sm:$0xff]
    %v344 = vld [vmem:[#allocation9 + $0x78] sm:$0xff]
    %v345 = vld [vmem:[#allocation9 + $0x80] sm:$0xff]
    %v346 = vld [vmem:[#allocation9 + $0x88] sm:$0xff]
    %v347 = vld [vmem:[#allocation9 + $0x90] sm:$0xff]
    %v348 = vld [vmem:[#allocation9 + $0x98] sm:$0xff]
    %v349 = vld [vmem:[#allocation9 + $0xa0] sm:$0xff]
    %v350 = vld [vmem:[#allocation9 + $0xa8] sm:$0xff]
    %v351 = vld [vmem:[#allocation9 + $0xb0] sm:$0xff]
    %v352 = vld [vmem:[#allocation9 + $0xb8] sm:$0xff]
    %v353 = vld [vmem:[#allocation9 + $0xc0] sm:$0xff]
    %v354 = vld [vmem:[#allocation9 + $0xc8] sm:$0xff]
    %v355 = vld [vmem:[#allocation9 + $0xd0] sm:$0xff]
    %v356 = vld [vmem:[#allocation9 + $0xd8] sm:$0xff]
    %v357 = vld [vmem:[#allocation9 + $0xe0] sm:$0xff]
    %v358 = vld [vmem:[#allocation9 + $0xe8] sm:$0xff]
    %v359 = vld [vmem:[#allocation9 + $0xf0] sm:$0xff]
    %v360 = vld [vmem:[#allocation9 + $0xf8] sm:$0xff]
    %361 = vmatprep.subr.mxu0 0.0
    %362 = vmatpush1.msra.mxu0 %v329
    %363 = vmatprep.subr.mxu0 0.0
    %364 = vmatpush1.msra.mxu0 %v330
    %365 = vmatprep.subr.mxu0 0.0
    %366 = vmatpush1.msra.mxu0 %v331
    %367 = vmatprep.subr.mxu0 0.0
    %368 = vmatpush1.msra.mxu0 %v332
    %369 = vmatprep.subr.mxu0 0.0
    %370 = vmatpush1.msra.mxu0 %v333
    %371 = vmatprep.subr.mxu0 0.0
    %372 = vmatpush1.msra.mxu0 %v334
    %373 = vmatprep.subr.mxu0 0.0
    %374 = vmatpush1.msra.mxu0 %v335
    %375 = vmatprep.subr.mxu0 0.0
    %376 = vmatpush1.msra.mxu0 %v336
    %377 = vmatprep.subr.mxu0 0.0
    %378 = vmatpush1.msra.mxu0 %v337
    %379 = vmatprep.subr.mxu0 0.0
    %380 = vmatpush1.msra.mxu0 %v338
    %381 = vmatprep.subr.mxu0 0.0
    %382 = vmatpush1.msra.mxu0 %v339
    %383 = vmatprep.subr.mxu0 0.0
    %384 = vmatpush1.msra.mxu0 %v340
    %385 = vmatprep.subr.mxu0 0.0
    %386 = vmatpush1.msra.mxu0 %v341
    %387 = vmatprep.subr.mxu0 0.0
    %388 = vmatpush1.msra.mxu0 %v342
    %389 = vmatprep.subr.mxu0 0.0
    %390 = vmatpush1.msra.mxu0 %v343
    %391 = vmatprep.subr.mxu0 0.0
    %392 = vmatpush1.msra.mxu0 %v344
    %393 = vmatprep.subr.mxu0 0.0
    %394 = vmatpush1.msra.mxu0 %v345
    %395 = vmatprep.subr.mxu0 0.0
    %396 = vmatpush1.msra.mxu0 %v346
    %397 = vmatprep.subr.mxu0 0.0
    %398 = vmatpush1.msra.mxu0 %v347
    %399 = vmatprep.subr.mxu0 0.0
    %400 = vmatpush1.msra.mxu0 %v348
    %401 = vmatprep.subr.mxu0 0.0
    %402 = vmatpush1.msra.mxu0 %v349
    %403 = vmatprep.subr.mxu0 0.0
    %404 = vmatpush1.msra.mxu0 %v350
    %405 = vmatprep.subr.mxu0 0.0
    %406 = vmatpush1.msra.mxu0 %v351
    %407 = vmatprep.subr.mxu0 0.0
    %408 = vmatpush1.msra.mxu0 %v352
    %409 = vmatprep.subr.mxu0 0.0
    %410 = vmatpush1.msra.mxu0 %v353
    %411 = vmatprep.subr.mxu0 0.0
    %412 = vmatpush1.msra.mxu0 %v354
    %413 = vmatprep.subr.mxu0 0.0
    %414 = vmatpush1.msra.mxu0 %v355
    %415 = vmatprep.subr.mxu0 0.0
    %416 = vmatpush1.msra.mxu0 %v356
    %417 = vmatprep.subr.mxu0 0.0
    %418 = vmatpush1.msra.mxu0 %v357
    %419 = vmatprep.subr.mxu0 0.0
    %420 = vmatpush1.msra.mxu0 %v358
    %421 = vmatprep.subr.mxu0 0.0
    %422 = vmatpush1.msra.mxu0 %v359
    %423 = vmatprep.subr.mxu0 0.0
    %424 = vmatpush1.msra.mxu0 %v360
    %425 = vmatprep.mubr.f32.mxu0 %v324
    %426 = vmatmul.mubr.f32.gmra.mrb[0].mxu0 %v323
    %v427 = vpop.f32.mrb[0].mxu0
    %v428 = vadd.f32 0.0, %v427
    %v429 = vpop.f32.mrb[0].mxu0
    %430 = vmatprep.mubr.f32.mxu0 %v326
    %431 = vmatmul.mubr.f32.gmra.mrb[0].mxu0 %v325
    %v432 = vpop.f32.mrb[0].mxu0
    %v433 = vadd.f32 0.0, %v432
    %v434 = vpop.f32.mrb[0].mxu0
    %435 = vdwg.mxu0
    %v436 = vadd.f32 %v327, %v428
    %v437 = vadd.f32 %v328, %v433
    %438 = vst [vmem:[#allocation2] sm:$0xff] %v436
    %439 = vst [vmem:[#allocation2 + $0x8] sm:$0xff] %v437
    // Predicated region
    $region38: #{tpu_custom_call.1} parent=1 // pred_check
      %p440 = pneg %p73
    $region39: #{tpu_custom_call.1} parent=1 // pred_check_branch
      %442 = sbr.rel (%p440) target = $region41
    $region40: #{tpu_custom_call.1} parent=1 // pred_region
      %v443 = vld [vmem:[#allocation2] sm:$0xff]
      %v444 = vld [vmem:[#allocation2 + $0x8] sm:$0xff]
      %445 = vst [vmem:[#allocation11] sm:$0xff] %v443
      %446 = vst [vmem:[#allocation11 + $0x8] sm:$0xff] %v444
    $region41: #{tpu_custom_call.1} parent=1 // pred_fallthru
      _
    // Predicated region
    $region42: #{tpu_custom_call.1} parent=1 // pred_check
      _
    $region43: #{tpu_custom_call.1} parent=1 // pred_check_branch
      %448 = sbr.rel (0) target = $region45
    $region44: #{tpu_custom_call.1} parent=1 // pred_region
      %s450 = ssub.s32 256, 256
      %451 = vsyncadd [#allocation5], %s450
      %s452 = sshll.u32 [#allocation11], 4
      %s453 = int_to_ptr.vmem [resolvable:$true] %s452
      %458 = dma.vmem_to_hbm [thread:$0]  %s453, 256, %s4, [#allocation5], 128, 128, 8
    $region45: #{tpu_custom_call.1} parent=1 // pred_fallthru
      _
    // Predicated region
    $region46: #{tpu_custom_call.1} parent=1 // pred_check
      _
    $region47: #{tpu_custom_call.1} parent=1 // pred_check_branch
      %460 = sbr.rel (0) target = $region49
    $region48: #{tpu_custom_call.1} parent=1 // pred_region
      %461 = dma.done [#allocation5], 256
    $region49: #{tpu_custom_call.1} parent=1 // pred_fallthru
      _
    %462 = vsyncpa [#allocation4], 1
    %463 = vsyncpa [#allocation7], 1
    %464 = vsyncpa [#allocation10], 1
    %465 = vsyncpa [#allocation5], 1

</llo_original>
